<compile_context>
chip_gen: v5e
topology: v5e:2x2
jax: 0.10.0
libtpu: 0.0.40
codegen_flags: <defaults>
</compile_context>

<pallas_src>
import math
import jax
import jax.numpy as jnp
from jax.experimental import pallas as pl
from jax.experimental.pallas import tpu as pltpu

EMB_SIZE = 256                       # self.emb_sizes = [256, 256, 256, 256]
SQRT_D = math.sqrt(EMB_SIZE)         # Embeddings.forward: lut(x) * sqrt(d_model)
N_FAMILIES = 4                       # Bar / Position / Pitch / Duration
LANE = 128


def _round_up(x, m):
    return ((x + m - 1) // m) * m


def _fused_emb_kernel(cidx_ref, ftab_ref, b_ref, o_ref):
    """cidx:(TM,4) i32 | ftab:(Vpad,Hpad) | b:(1,Hpad) f32 | o:(TM,Hpad) f32.

    out = combined_one_hot(cidx) @ ftab + b   (single K=Vpad MXU matmul).
    Family index regions are disjoint; only the shared zero row can be hit
    multiple times and it is all-zeros, so multiplicity is harmless.
    """
    TM = cidx_ref.shape[0]
    Vpad = ftab_ref.shape[0]
    iota = jax.lax.broadcasted_iota(jnp.int32, (TM, Vpad), 1)
    onehot = jnp.zeros((TM, Vpad), jnp.float32)
    for f in range(N_FAMILIES):
        col = cidx_ref[:, pl.ds(f, 1)]                      # (TM, 1) int32
        onehot = onehot + (iota == col).astype(jnp.float32)
    acc = jnp.dot(onehot.astype(ftab_ref.dtype), ftab_ref[...],
                  preferred_element_type=jnp.float32)       # (TM, Hpad)
    o_ref[...] = (acc + b_ref[...]).astype(o_ref.dtype)


def build_fused_frontend(params, compute_dtype=jnp.float32):
    """Fold the 4 embedding tables + in_linear + special embeddings into one table.

    Row layout:
      [ tbl0@W0*sqrt(d) | tbl1@W1*sqrt(d) | tbl2@W2*sqrt(d) | tbl3@W3*sqrt(d)
        | special0 - b | special1 - b | zero pad rows ... ]   -> (Vpad, Hpad)
    Adding the bias inside the kernel then reproduces in_linear(concat(embs))
    for token rows and former.embeddings.word_embeddings(special_mark) for the
    prepended special-token rows.
    """
    W = params["in_linear_w"].astype(jnp.float32)            # (1024, H)
    b = params["in_linear_b"].astype(jnp.float32)            # (1, H)
    H = W.shape[1]
    Hpad = _round_up(H, LANE)

    pieces, offsets, off = [], [], 0
    for i in range(N_FAMILIES):
        tbl = params[f"tbl{i}"].astype(jnp.float32)          # (V_i, 256)
        w_i = W[i * EMB_SIZE:(i + 1) * EMB_SIZE, :]          # (256, H)
        pieces.append((tbl @ w_i) * SQRT_D)                  # (V_i, H)
        offsets.append(off)
        off += tbl.shape[0]

    special_off = off
    pieces.append(params["former_word_emb"][:2].astype(jnp.float32) - b)  # (2, H)
    off += 2

    Vpad = _round_up(off + 1, LANE)                          # guarantee >=1 zero row
    ftab = jnp.concatenate(pieces, axis=0)
    ftab = jnp.pad(ftab, ((0, Vpad - off), (0, Hpad - H)))
    bias = jnp.pad(b, ((0, 0), (0, Hpad - H)))

    return {
        "ftab": ftab.astype(compute_dtype),
        "bias": bias,                                        # f32, added post-accum
        "offsets": jnp.asarray(offsets, jnp.int32),
        "special_off": special_off,
        "zero_row": Vpad - 1,
        "H": H, "Hpad": Hpad, "Vpad": Vpad,
    }


def midi_former_no_attn_forward(fused, input_ids, attn_mask, mode="mlm", tm=512):
    """MidiFormerNoAttn.forward front-end (use_fif=False).

    Returns the (bs, slen+1, hidden) fused input embeddings (special token
    prepended) and the extended attention mask — exactly the inputs of
    self.former(...).
    """
    bs, slen, nf = input_ids.shape
    assert nf == N_FAMILIES
    H, Hpad, Vpad = fused["H"], fused["Hpad"], fused["Vpad"]

    # Combined indices into the fused table; special-token row prepended per
    # batch so the kernel writes the full (slen+1) output directly (no second
    # full-activation jnp.concatenate / extra HBM pass).
    comb = input_ids.astype(jnp.int32) + fused["offsets"][None, None, :]
    special_id = 0 if mode == "mlm" else 1
    special_row = jnp.full((bs, 1, N_FAMILIES), fused["zero_row"], jnp.int32)
    special_row = special_row.at[:, :, 0].set(fused["special_off"] + special_id)
    cidx = jnp.concatenate([special_row, comb], axis=1).reshape(-1, N_FAMILIES)

    M_ext = bs * (slen + 1)
    TM = tm if M_ext >= tm else _round_up(M_ext, 8)          # small-problem clamp
    M_pad = _round_up(M_ext, TM)
    if M_pad > M_ext:  # padded rows hit the zero table row; sliced off below
        pad_rows = jnp.full((M_pad - M_ext, N_FAMILIES), fused["zero_row"], jnp.int32)
        cidx = jnp.concatenate([cidx, pad_rows], axis=0)

    grid = (M_pad // TM,)
    itemsize = fused["ftab"].dtype.itemsize
    out = pl.pallas_call(
        _fused_emb_kernel,
        out_shape=jax.ShapeDtypeStruct((M_pad, Hpad), jnp.float32),
        grid_spec=pltpu.PrefetchScalarGridSpec(
            num_scalar_prefetch=0,
            grid=grid,
            in_specs=[
                pl.BlockSpec((TM, N_FAMILIES), lambda i: (i, 0)),   # streamed ids
                pl.BlockSpec((Vpad, Hpad), lambda i: (0, 0)),       # resident fused table
                pl.BlockSpec((1, Hpad), lambda i: (0, 0)),          # resident bias
            ],
            out_specs=pl.BlockSpec((TM, Hpad), lambda i: (i, 0)),
        ),
        compiler_params=pltpu.CompilerParams(
            dimension_semantics=("parallel",)),                     # v7x: 2-TC sharding
        cost_estimate=pl.CostEstimate(
            flops=2 * M_pad * Vpad * Hpad,
            transcendentals=0,
            bytes_accessed=(M_pad * N_FAMILIES * 4 + M_pad * Hpad * 4
                            + Vpad * Hpad * itemsize + Hpad * 4)),
    )(cidx, fused["ftab"], fused["bias"])

    emb_cat = out[:M_ext, :H].reshape(bs, slen + 1, H)
    attn_mask_full = jnp.concatenate(
        [jnp.ones((bs, 1), attn_mask.dtype), attn_mask], axis=1)

    # TODO(synk): self.former(inputs_embeds=emb_cat, attention_mask=attn_mask_full)
    # (FormerModel / BERT encoder) is not defined in the provided source.
    return emb_cat, attn_mask_full


def _reference_forward(params, input_ids, attn_mask, mode="mlm"):
    """Pure-JAX reference of the original (unfused) torch semantics."""
    bs, slen, _ = input_ids.shape
    embs = []
    for i in range(N_FAMILIES):
        embs.append(jnp.take(params[f"tbl{i}"], input_ids[..., i], axis=0) * SQRT_D)
    embs = jnp.concatenate(embs, axis=-1)                                # (bs,slen,1024)
    emb_linear = embs @ params["in_linear_w"] + params["in_linear_b"][0]
    special_id = 0 if mode == "mlm" else 1
    special_mark = jnp.full((bs, 1), special_id, dtype=jnp.int32)
    special_emb = jnp.take(params["former_word_emb"], special_mark, axis=0)
    emb_cat = jnp.concatenate([special_emb, emb_linear], axis=1)
    attn_mask_full = jnp.concatenate(
        [jnp.ones((bs, 1), attn_mask.dtype), attn_mask], axis=1)
    return emb_cat, attn_mask_full


if __name__ == "__main__":
    key = jax.random.PRNGKey(0)
    bs, slen = 2, 8
    hidden = 32                         # formerConfig.hidden_size
    n_tokens = [10, 12, 14, 16]         # len(e2w[key]) for the 4 CP families
    former_vocab = 4                    # former word-embedding vocab (>= 2 specials)

    keys = jax.random.split(key, 10)
    params = {
        "tbl0": jax.random.normal(keys[0], (n_tokens[0], EMB_SIZE), jnp.float32),
        "tbl1": jax.random.normal(keys[1], (n_tokens[1], EMB_SIZE), jnp.float32),
        "tbl2": jax.random.normal(keys[2], (n_tokens[2], EMB_SIZE), jnp.float32),
        "tbl3": jax.random.normal(keys[3], (n_tokens[3], EMB_SIZE), jnp.float32),
        # in_linear: nn.Linear(sum(emb_sizes)=1024, hidden); stored as (in, out)
        "in_linear_w": jax.random.normal(keys[4], (4 * EMB_SIZE, hidden), jnp.float32) * 0.02,
        "in_linear_b": jax.random.normal(keys[5], (1, hidden), jnp.float32) * 0.02,
        # former.embeddings.word_embeddings
        "former_word_emb": jax.random.normal(keys[6], (former_vocab, hidden), jnp.float32),
    }

    input_ids = jnp.stack(
        [jax.random.randint(jax.random.fold_in(keys[7], i), (bs, slen), 0, n_tokens[i])
         for i in range(N_FAMILIES)], axis=-1).astype(jnp.int32)         # (bs, slen, 4)
    attn_mask = jnp.ones((bs, slen), jnp.float32)

    ref_out, ref_mask = _reference_forward(params, input_ids, attn_mask, mode="mlm")

    # f32 fused path: must match the torch semantics tightly.
    fused_f32 = build_fused_frontend(params, compute_dtype=jnp.float32)
    out, mask_out = midi_former_no_attn_forward(fused_f32, input_ids, attn_mask, mode="mlm")
    jax.block_until_ready(out)
    jax.block_until_ready(mask_out)
    assert out.shape == (bs, slen + 1, hidden)
    assert mask_out.shape == (bs, slen + 1)
    assert jnp.allclose(out, ref_out, atol=1e-3, rtol=1e-3)
    assert jnp.allclose(mask_out, ref_mask)

    # bf16 fused-table path (MXU-peak / half DMA for the resident table).
    fused_bf16 = build_fused_frontend(params, compute_dtype=jnp.bfloat16)
    out_bf16, _ = midi_former_no_attn_forward(fused_bf16, input_ids, attn_mask, mode="mlm")
    jax.block_until_ready(out_bf16)
    assert jnp.allclose(out_bf16, ref_out, atol=1e-1, rtol=5e-2)

    print("KERNEL_OK")
</pallas_src>

<mosaic_0001>
module attributes {stable_mosaic.version = 11 : i64} {
  func.func @_fused_emb_kernel(%arg0: i32, %arg1: memref<24x4xi32, #tpu.memory_space<vmem>>, %arg2: memref<128x128xf32, #tpu.memory_space<vmem>>, %arg3: memref<1x128xf32, #tpu.memory_space<vmem>>, %arg4: memref<24x128xf32, #tpu.memory_space<vmem>>) attributes {dimension_semantics = [#tpu.dimension_semantics<parallel>], iteration_bounds = array<i64: 1>, scalar_prefetch = 0 : i64, scratch_operands = 0 : i64, tpu.core_type = #tpu.core_type<tc>, window_params = [{transform_indices = @transform_0, window_bounds = array<i64: 24, 4>}, {pipeline_mode = #tpu.pipeline_mode<synchronous>, transform_indices = @transform_1, window_bounds = array<i64: 128, 128>}, {pipeline_mode = #tpu.pipeline_mode<synchronous>, transform_indices = @transform_2, window_bounds = array<i64: 1, 128>}, {transform_indices = @transform_3, window_bounds = array<i64: 24, 128>}]} {
    %0 = tpu.iota {dimensions = array<i32: 1>} : vector<24x128xi32>
    %cst = arith.constant 0.000000e+00 : f32
    %1 = vector.broadcast %cst : f32 to vector<24x128xf32>
    %c0 = arith.constant 0 : index
    %c0_0 = arith.constant 0 : index
    %2 = vector.load %arg1[%c0, %c0_0] : memref<24x4xi32, #tpu.memory_space<vmem>>, vector<24x1xi32>
    %3 = vector.broadcast %2 : vector<24x1xi32> to vector<24x128xi32>
    %4 = arith.cmpi eq, %0, %3 : vector<24x128xi32>
    %5 = arith.extui %4 : vector<24x128xi1> to vector<24x128xi32>
    %6 = arith.sitofp %5 : vector<24x128xi32> to vector<24x128xf32>
    %7 = arith.addf %1, %6 : vector<24x128xf32>
    %c0_1 = arith.constant 0 : index
    %c1 = arith.constant 1 : index
    %8 = vector.load %arg1[%c0_1, %c1] : memref<24x4xi32, #tpu.memory_space<vmem>>, vector<24x1xi32>
    %9 = vector.broadcast %8 : vector<24x1xi32> to vector<24x128xi32>
    %10 = arith.cmpi eq, %0, %9 : vector<24x128xi32>
    %11 = arith.extui %10 : vector<24x128xi1> to vector<24x128xi32>
    %12 = arith.sitofp %11 : vector<24x128xi32> to vector<24x128xf32>
    %13 = arith.addf %7, %12 : vector<24x128xf32>
    %c0_2 = arith.constant 0 : index
    %c2 = arith.constant 2 : index
    %14 = vector.load %arg1[%c0_2, %c2] : memref<24x4xi32, #tpu.memory_space<vmem>>, vector<24x1xi32>
    %15 = vector.broadcast %14 : vector<24x1xi32> to vector<24x128xi32>
    %16 = arith.cmpi eq, %0, %15 : vector<24x128xi32>
    %17 = arith.extui %16 : vector<24x128xi1> to vector<24x128xi32>
    %18 = arith.sitofp %17 : vector<24x128xi32> to vector<24x128xf32>
    %19 = arith.addf %13, %18 : vector<24x128xf32>
    %c0_3 = arith.constant 0 : index
    %c3 = arith.constant 3 : index
    %20 = vector.load %arg1[%c0_3, %c3] : memref<24x4xi32, #tpu.memory_space<vmem>>, vector<24x1xi32>
    %21 = vector.broadcast %20 : vector<24x1xi32> to vector<24x128xi32>
    %22 = arith.cmpi eq, %0, %21 : vector<24x128xi32>
    %23 = arith.extui %22 : vector<24x128xi1> to vector<24x128xi32>
    %24 = arith.sitofp %23 : vector<24x128xi32> to vector<24x128xf32>
    %25 = arith.addf %19, %24 : vector<24x128xf32>
    %c0_4 = arith.constant 0 : index
    %c0_5 = arith.constant 0 : index
    %26 = vector.load %arg2[%c0_4, %c0_5] : memref<128x128xf32, #tpu.memory_space<vmem>>, vector<128x128xf32>
    %cst_6 = arith.constant dense<0.000000e+00> : vector<24x128xf32>
    %27 = tpu.matmul %25, %26, %cst_6 {dimension_numbers = #tpu.dot_dimension_numbers<[1], [0], [0], [1], [0, 0, 1, 1], [], []>} : vector<24x128xf32>, vector<128x128xf32>, vector<24x128xf32> -> vector<24x128xf32>
    %c0_7 = arith.constant 0 : index
    %c0_8 = arith.constant 0 : index
    %28 = vector.load %arg3[%c0_7, %c0_8] : memref<1x128xf32, #tpu.memory_space<vmem>>, vector<1x128xf32>
    %29 = vector.broadcast %28 : vector<1x128xf32> to vector<24x128xf32>
    %30 = arith.addf %27, %29 : vector<24x128xf32>
    %c0_9 = arith.constant 0 : index
    %c0_10 = arith.constant 0 : index
    %31 = vector.load %arg4[%c0_9, %c0_10] : memref<24x128xf32, #tpu.memory_space<vmem>>, vector<24x128xf32>
    tpu.vector_store %arg4[%c0_9, %c0_10], %30 {strides = array<i32>} : memref<24x128xf32, #tpu.memory_space<vmem>>, vector<24x128xf32>,
    return
  }
  func.func @transform_0(%arg0: i32) -> (i32, i32) {
    %c0_i32 = arith.constant 0 : i32
    %c0_i32_0 = arith.constant 0 : i32
    return %arg0, %c0_i32 : i32, i32
  }
  func.func @transform_1(%arg0: i32) -> (i32, i32) {
    %c0_i32 = arith.constant 0 : i32
    %c0_i32_0 = arith.constant 0 : i32
    %c0_i32_1 = arith.constant 0 : i32
    return %c0_i32, %c0_i32_0 : i32, i32
  }
  func.func @transform_2(%arg0: i32) -> (i32, i32) {
    %c0_i32 = arith.constant 0 : i32
    %c0_i32_0 = arith.constant 0 : i32
    %c0_i32_1 = arith.constant 0 : i32
    return %c0_i32, %c0_i32_0 : i32, i32
  }
  func.func @transform_3(%arg0: i32) -> (i32, i32) {
    %c0_i32 = arith.constant 0 : i32
    %c0_i32_0 = arith.constant 0 : i32
    return %arg0, %c0_i32 : i32, i32
  }
}

</mosaic_0001>

<llo_original>
// kernel: tpu_custom_call.1
$region0: #{tpu_custom_call.1}
  #allocation0 [shape = 'u32[]', space=smem, size = 0x4, offset = 0x4, fixed_abs, tag = 'smem constant byte address 0x4 - core index']
  #allocation1 [shape = 'u32[72,128]{1,0:T(1,128)}', space=vmem, size = 0x9000, scoped, tag = 'internal scratch']
  %s0 = inlined_call_operand.vmem [shape: s32[24,4], index: 0, kind: input, shape index: {}]
  %s1 = inlined_call_operand.hbm [shape: f32[128,128], index: 1, kind: input, shape index: {}]
  %s2 = inlined_call_operand.vmem [shape: f32[1,128], index: 2, kind: input, shape index: {}]
  %s3 = inlined_call_operand.hbm [shape: f32[24,128], index: 3, kind: output, shape index: {}]
  %s4 = sld [smem:[#allocation0]]
  $region26: #{tpu_custom_call.1} parent=0
    _
  %s6 = ssub.s32 1, %s4
  %s7 = scalar_select 0, %s6, %s4
  $region1: #{tpu_custom_call.1} parent=0
    #allocation2 [shape = 'u8[65536]{0}', space=vmem, size = 0x10000, scoped, tag = 'input window, operand 1, single buffered']
    #allocation3 [shape = 's32[1]{0}', space=sflag, size = 0x4, scoped, tag = 'scoped memory for tpu_custom_call.1']
    #allocation4 [shape = 's32[1]{0}', space=sflag, size = 0x4, scoped, tag = 'scoped memory for tpu_custom_call.1']
    #allocation5 [shape = 'u8[12288]{0}', space=vmem, size = 0x3000, scoped, tag = 'output window, operand 0, single buffered']
    %8 = vsyncpa [#allocation3], 0
    %9 = vsyncpa [#allocation4], 0
    // Predicated region
    $region2: #{tpu_custom_call.1} parent=1 // pred_check
      _
    $region3: #{tpu_custom_call.1} parent=1 // pred_check_branch
      %11 = sbr.rel (0) target = $region5
    $region4: #{tpu_custom_call.1} parent=1 // pred_region
      _
    $region5: #{tpu_custom_call.1} parent=1 // pred_fallthru
      _
    // Predicated region
    $region6: #{tpu_custom_call.1} parent=1 // pred_check
      _
    $region7: #{tpu_custom_call.1} parent=1 // pred_check_branch
      %13 = sbr.rel (0) target = $region9
    $region8: #{tpu_custom_call.1} parent=1 // pred_region
      %15 = vsyncadd [#allocation3], 0
      %s16 = sshll.u32 %s1, 4
      %s17 = int_to_ptr.hbm [resolvable:$true] %s16
      %s18 = sshll.u32 [#allocation2], 4
      %s19 = int_to_ptr.vmem [resolvable:$true] %s18
      %24 = dma.hbm_to_vmem [thread:$0]  %s17, 2048, %s19, [#allocation3], 128, 128, 8
    $region9: #{tpu_custom_call.1} parent=1 // pred_fallthru
      _
    // Predicated region
    $region10: #{tpu_custom_call.1} parent=1 // pred_check
      _
    $region11: #{tpu_custom_call.1} parent=1 // pred_check_branch
      %26 = sbr.rel (0) target = $region13
    $region12: #{tpu_custom_call.1} parent=1 // pred_region
      _
    $region13: #{tpu_custom_call.1} parent=1 // pred_fallthru
      _
    // Predicated region
    $region14: #{tpu_custom_call.1} parent=1 // pred_check
      _
    $region15: #{tpu_custom_call.1} parent=1 // pred_check_branch
      %28 = sbr.rel (0) target = $region17
    $region16: #{tpu_custom_call.1} parent=1 // pred_region
      %30 = dma.done [#allocation3], 2048
    $region17: #{tpu_custom_call.1} parent=1 // pred_fallthru
      _
    %v31 = vlaneseq
    %v32 = vand.u32 %v31, 127
    %v33 = vld [vmem:[%s0] sm:$0xff]
    %v34 = vld [vmem:[%s0 + $0x8] sm:$0xff]
    %v35 = vld [vmem:[%s0 + $0x10] sm:$0xff]
    %36 = vset.pattern.permute.xlu0 0
    %37 = vperm.xlu0 %36, %v33
    %v38 = vpop.permute.xlu0 %37
    %39 = vset.pattern.permute.xlu0 0
    %40 = vperm.xlu0 %39, %v34
    %v41 = vpop.permute.xlu0 %40
    %42 = vset.pattern.permute.xlu0 0
    %43 = vperm.xlu0 %42, %v35
    %v44 = vpop.permute.xlu0 %43
    %vm45 = vcmp.eq.s32.totalorder %v32, %v38
    %vm46 = vcmp.eq.s32.totalorder %v32, %v41
    %vm47 = vcmp.eq.s32.totalorder %v32, %v44
    %v48 = vsel %vm45, 1, 0
    %v49 = vsel %vm46, 1, 0
    %v50 = vsel %vm47, 1, 0
    %v51 = vcvt.s32.f32 %v48
    %v52 = vcvt.s32.f32 %v49
    %v53 = vcvt.s32.f32 %v50
    %v54 = vadd.f32 %v51, 0.0
    %v55 = vadd.f32 %v52, 0.0
    %v56 = vadd.f32 %v53, 0.0
    %57 = vset.pattern.permute.xlu0 1
    %58 = vperm.xlu0 %57, %v33
    %v59 = vpop.permute.xlu0 %58
    %60 = vset.pattern.permute.xlu0 1
    %61 = vperm.xlu0 %60, %v34
    %v62 = vpop.permute.xlu0 %61
    %63 = vset.pattern.permute.xlu0 1
    %64 = vperm.xlu0 %63, %v35
    %v65 = vpop.permute.xlu0 %64
    %vm66 = vcmp.eq.s32.totalorder %v32, %v59
    %vm67 = vcmp.eq.s32.totalorder %v32, %v62
    %vm68 = vcmp.eq.s32.totalorder %v32, %v65
    %v69 = vsel %vm66, 1, 0
    %v70 = vsel %vm67, 1, 0
    %v71 = vsel %vm68, 1, 0
    %v72 = vcvt.s32.f32 %v69
    %v73 = vcvt.s32.f32 %v70
    %v74 = vcvt.s32.f32 %v71
    %v75 = vadd.f32 %v54, %v72
    %v76 = vadd.f32 %v55, %v73
    %v77 = vadd.f32 %v56, %v74
    %78 = vset.pattern.permute.xlu0 2
    %79 = vperm.xlu0 %78, %v33
    %v80 = vpop.permute.xlu0 %79
    %81 = vset.pattern.permute.xlu0 2
    %82 = vperm.xlu0 %81, %v34
    %v83 = vpop.permute.xlu0 %82
    %84 = vset.pattern.permute.xlu0 2
    %85 = vperm.xlu0 %84, %v35
    %v86 = vpop.permute.xlu0 %85
    %vm87 = vcmp.eq.s32.totalorder %v32, %v80
    %vm88 = vcmp.eq.s32.totalorder %v32, %v83
    %vm89 = vcmp.eq.s32.totalorder %v32, %v86
    %v90 = vsel %vm87, 1, 0
    %v91 = vsel %vm88, 1, 0
    %v92 = vsel %vm89, 1, 0
    %v93 = vcvt.s32.f32 %v90
    %v94 = vcvt.s32.f32 %v91
    %v95 = vcvt.s32.f32 %v92
    %v96 = vadd.f32 %v75, %v93
    %v97 = vadd.f32 %v76, %v94
    %v98 = vadd.f32 %v77, %v95
    %99 = vset.pattern.permute.xlu0 3
    %100 = vperm.xlu0 %99, %v33
    %v101 = vpop.permute.xlu0 %100
    %102 = vset.pattern.permute.xlu0 3
    %103 = vperm.xlu0 %102, %v34
    %v104 = vpop.permute.xlu0 %103
    %105 = vset.pattern.permute.xlu0 3
    %106 = vperm.xlu0 %105, %v35
    %v107 = vpop.permute.xlu0 %106
    %vm108 = vcmp.eq.s32.totalorder %v32, %v101
    %vm109 = vcmp.eq.s32.totalorder %v32, %v104
    %vm110 = vcmp.eq.s32.totalorder %v32, %v107
    %v111 = vsel %vm108, 1, 0
    %v112 = vsel %vm109, 1, 0
    %v113 = vsel %vm110, 1, 0
    %v114 = vcvt.s32.f32 %v111
    %v115 = vcvt.s32.f32 %v112
    %v116 = vcvt.s32.f32 %v113
    %v117 = vadd.f32 %v96, %v114
    %v118 = vadd.f32 %v97, %v115
    %v119 = vadd.f32 %v98, %v116
    %v120 = vld [vmem:[#allocation2] sm:$0xff]
    %v121 = vld [vmem:[#allocation2 + $0x8] sm:$0xff]
    %v122 = vld [vmem:[#allocation2 + $0x10] sm:$0xff]
    %v123 = vld [vmem:[#allocation2 + $0x18] sm:$0xff]
    %v124 = vld [vmem:[#allocation2 + $0x20] sm:$0xff]
    %v125 = vld [vmem:[#allocation2 + $0x28] sm:$0xff]
    %v126 = vld [vmem:[#allocation2 + $0x30] sm:$0xff]
    %v127 = vld [vmem:[#allocation2 + $0x38] sm:$0xff]
    %v128 = vld [vmem:[#allocation2 + $0x40] sm:$0xff]
    %v129 = vld [vmem:[#allocation2 + $0x48] sm:$0xff]
    %v130 = vld [vmem:[#allocation2 + $0x50] sm:$0xff]
    %v131 = vld [vmem:[#allocation2 + $0x58] sm:$0xff]
    %v132 = vld [vmem:[#allocation2 + $0x60] sm:$0xff]
    %v133 = vld [vmem:[#allocation2 + $0x68] sm:$0xff]
    %v134 = vld [vmem:[#allocation2 + $0x70] sm:$0xff]
    %v135 = vld [vmem:[#allocation2 + $0x78] sm:$0xff]
    %v136 = vld [vmem:[%s2] sm:$0x1]
    %v138 = vperm.slane %v136, 0
    %140 = vmatpush.msra.mxu0 %v135
    %141 = vmatpush.msra.mxu0 %v134
    %142 = vmatpush.msra.mxu0 %v133
    %143 = vmatpush.msra.mxu0 %v132
    %144 = vmatpush.msra.mxu0 %v131
    %145 = vmatpush.msra.mxu0 %v130
    %146 = vmatpush.msra.mxu0 %v129
    %147 = vmatpush.msra.mxu0 %v128
    %148 = vmatpush.msra.mxu0 %v127
    %149 = vmatpush.msra.mxu0 %v126
    %150 = vmatpush.msra.mxu0 %v125
    %151 = vmatpush.msra.mxu0 %v124
    %152 = vmatpush.msra.mxu0 %v123
    %153 = vmatpush.msra.mxu0 %v122
    %154 = vmatpush.msra.mxu0 %v121
    %155 = vmatpush.msra.mxu0 %v120
    %156 = vmatmul.f32.gmra.mxu0 %v117
    %v157 = vpop.f32.mrf.mxu0
    %v158 = vadd.f32 %v138, %v157
    %159 = vmatmul.f32.gmra.mxu0 %v118
    %v160 = vpop.f32.mrf.mxu0
    %v161 = vadd.f32 %v138, %v160
    %162 = vmatmul.f32.gmra.mxu0 %v119
    %v163 = vpop.f32.mrf.mxu0
    %v164 = vadd.f32 %v138, %v163
    %165 = vdwg.mxu0
    %166 = vst [vmem:[#allocation5] sm:$0xff] %v158
    %167 = vst [vmem:[#allocation5 + $0x8] sm:$0xff] %v161
    %168 = vst [vmem:[#allocation5 + $0x10] sm:$0xff] %v164
    // Predicated region
    $region18: #{tpu_custom_call.1} parent=1 // pred_check
      _
    $region19: #{tpu_custom_call.1} parent=1 // pred_check_branch
      %170 = sbr.rel (0) target = $region21
    $region20: #{tpu_custom_call.1} parent=1 // pred_region
      %172 = vsyncadd [#allocation4], 0
      %s173 = sshll.u32 [#allocation5], 4
      %s174 = int_to_ptr.vmem [resolvable:$true] %s173
      %s175 = sshll.u32 %s3, 4
      %s176 = int_to_ptr.hbm [resolvable:$true] %s175
      %181 = dma.vmem_to_hbm [thread:$0]  %s174, 384, %s176, [#allocation4], 128, 128, 8
    $region21: #{tpu_custom_call.1} parent=1 // pred_fallthru
      _
    // Predicated region
    $region22: #{tpu_custom_call.1} parent=1 // pred_check
      _
    $region23: #{tpu_custom_call.1} parent=1 // pred_check_branch
      %183 = sbr.rel (0) target = $region25
    $region24: #{tpu_custom_call.1} parent=1 // pred_region
      %185 = dma.done [#allocation4], 384
    $region25: #{tpu_custom_call.1} parent=1 // pred_fallthru
      _
    %186 = vsyncpa [#allocation3], 1
    %187 = vsyncpa [#allocation4], 1

</llo_original>
